<compile_context>
chip_gen: v7x
topology: tpu7x:2x2x1
jax: 0.10.0
libtpu: 0.0.40
codegen_flags: <defaults>
</compile_context>

<pallas_src>
import functools

import numpy as np
import jax
import jax.numpy as jnp
from jax.experimental import pallas as pl
from jax.experimental.pallas import tpu as pltpu

F_PAD = 128  # lane-dense feature slab width (>= max layer width 64)


def _round_up(x, m):
    return (x + m - 1) // m * m


# ----------------------------- fused Pallas kernel --------------------------

def _fused_gnn_kernel(a_ref, x_ref, w1_ref, b1_ref, w2_ref, b2_ref,
                      w3_ref, b3_ref, p_ref, o_ref):
    """relu-GCN x3 with pre-ReLU residual + global mean pool, all in VMEM.

    a_ref : (Np, Np)  bf16   symmetrically normalized adjacency (zero-padded)
    x_ref : (Np, 128) f32    embedded node features (zero-padded lanes)
    w*_ref: (128,128) f32    GCN weights zero-padded to the 128-lane slab
    b*_ref: (1, 128)  f32    GCN biases  zero-padded
    p_ref : (Gp, Np)  f32    mean-pool matrix (rows hold 1/count, zero-padded)
    o_ref : (Gp, 128) f32    pooled graph embeddings (lane-dense output)
    """
    a = a_ref[...]                                     # bf16 (Np, Np)
    x0 = x_ref[...]                                    # f32  (Np, 128)

    # Layer 1 (8 -> 32): in < out  =>  (A @ x) @ W1 + b1
    ax = jnp.dot(a, x0.astype(jnp.bfloat16), preferred_element_type=jnp.float32)
    x1 = jnp.dot(ax.astype(jnp.bfloat16), w1_ref[...].astype(jnp.bfloat16),
                 preferred_element_type=jnp.float32) + b1_ref[...]
    h = jnp.maximum(x1, 0.0)

    # Layer 2 (32 -> 64): in < out  =>  (A @ h) @ W2 + b2
    ah = jnp.dot(a, h.astype(jnp.bfloat16), preferred_element_type=jnp.float32)
    h = jnp.maximum(
        jnp.dot(ah.astype(jnp.bfloat16), w2_ref[...].astype(jnp.bfloat16),
                preferred_element_type=jnp.float32) + b2_ref[...], 0.0)

    # Layer 3 (64 -> 32): in > out  =>  A @ (h @ W3) + b3
    hw = jnp.dot(h.astype(jnp.bfloat16), w3_ref[...].astype(jnp.bfloat16),
                 preferred_element_type=jnp.float32)
    h = jnp.maximum(
        jnp.dot(a, hw.astype(jnp.bfloat16), preferred_element_type=jnp.float32)
        + b3_ref[...], 0.0)

    # Residual with the PRE-ReLU output of layer 1 (as in the PyTorch module).
    h = h + x1

    # global_mean_pool as one matmul with the precomputed pooling matrix.
    o_ref[...] = jnp.dot(p_ref[...], h, preferred_element_type=jnp.float32)


def fused_gnn_residual_pool(a_norm, x_emb, gcn_padded, pool_mat):
    n_pad = a_norm.shape[0]
    g_pad = pool_mat.shape[0]
    flops = int(3 * 2 * n_pad * n_pad * F_PAD          # aggregation matmuls
                + 3 * 2 * n_pad * F_PAD * F_PAD        # weight matmuls
                + 2 * g_pad * n_pad * F_PAD)           # pooling matmul
    bytes_accessed = int(a_norm.size * 2 + x_emb.size * 4 + pool_mat.size * 4
                         + sum(int(w.size) * 4 for w in gcn_padded)
                         + g_pad * F_PAD * 4)

    def vmem():
        return pl.BlockSpec(memory_space=pltpu.MemorySpace.VMEM)

    return pl.pallas_call(
        _fused_gnn_kernel,
        out_shape=jax.ShapeDtypeStruct((g_pad, F_PAD), jnp.float32),
        in_specs=[vmem() for _ in range(9)],
        out_specs=vmem(),
        compiler_params=pltpu.CompilerParams(vmem_limit_bytes=32 * 1024 * 1024),
        cost_estimate=pl.CostEstimate(flops=flops, transcendentals=0,
                                      bytes_accessed=bytes_accessed),
    )(a_norm, x_emb, *gcn_padded, pool_mat)


# ------------------------------- graph glue ---------------------------------

def dense_gcn_norm(edge_index, num_nodes):
    """Dense PyG gcn_norm: scatter-ADD adjacency (duplicate edges accumulate),
    add_remaining_self_loops, then D^-1/2 (A+I) D^-1/2.
    A[i, j] = w for edge j -> i (source_to_target flow)."""
    src = edge_index[0]
    dst = edge_index[1]
    a = jnp.zeros((num_nodes, num_nodes), jnp.float32).at[dst, src].add(1.0)
    diag = jnp.diagonal(a)
    # Only add self loops where none exist (matches add_remaining_self_loops).
    a = a + jnp.diag(jnp.where(diag > 0.0, 0.0, 1.0))
    deg = a.sum(axis=1)
    dinv = jnp.where(deg > 0, 1.0 / jnp.sqrt(deg), 0.0)
    return dinv[:, None] * a * dinv[None, :]


def prepare_graph(edge_index, total_nodes, sample_node_length):
    """Built ONCE per graph topology (hoisted out of the jitted hot path)."""
    n_pad = _round_up(total_nodes, 8)
    num_graphs = len(sample_node_length)
    g_pad = _round_up(num_graphs, 8)

    a_norm = dense_gcn_norm(edge_index, total_nodes)
    a_pad = jnp.zeros((n_pad, n_pad), jnp.bfloat16)
    a_pad = a_pad.at[:total_nodes, :total_nodes].set(a_norm.astype(jnp.bfloat16))

    p = np.zeros((g_pad, n_pad), np.float32)
    counter = 0
    for i, length in enumerate(sample_node_length):
        p[i, counter:counter + length] = 1.0 / float(length)
        counter += length
    return a_pad, jnp.asarray(p)


def pad_gcn_params(params):
    """Zero-pad GCN weights/biases to the 128-lane slab (done once)."""
    def pad_w(w):
        return jnp.zeros((F_PAD, F_PAD), jnp.float32).at[:w.shape[0], :w.shape[1]].set(w)

    def pad_b(b):
        return jnp.zeros((1, F_PAD), jnp.float32).at[:, :b.shape[1]].set(b)

    return (pad_w(params['g1_w']), pad_b(params['g1_b']),
            pad_w(params['g2_w']), pad_b(params['g2_b']),
            pad_w(params['g3_w']), pad_b(params['g3_b']))


# ------------------------------ forward pass --------------------------------

@functools.partial(jax.jit,
                   static_argnames=("feature_dim", "gnn_hidden_dim", "num_graphs"))
def gnn_residual_feature_extractor_forward(params, gcn_padded, data,
                                           a_norm_pad, pool_mat_pad, *,
                                           feature_dim, gnn_hidden_dim,
                                           num_graphs):
    """Mirrors GNN_Redisual_Feature_Extractor.forward."""
    n_pad = a_norm_pad.shape[0]

    # Node-type embeddings in plain jnp: XLA fuses the tiny matmuls + scatters.
    emb = jnp.zeros((n_pad, feature_dim), jnp.float32)
    if len(data['ev_indexes']) != 0:   # same gating as the PyTorch module
        emb = emb.at[data['ev_indexes']].set(
            data['ev_features'] @ params['ev_w'] + params['ev_b'])
        emb = emb.at[data['cs_indexes']].set(
            data['cs_features'] @ params['cs_w'] + params['cs_b'])
        emb = emb.at[data['tr_indexes']].set(
            data['tr_features'] @ params['tr_w'] + params['tr_b'])
    emb = emb.at[data['env_indexes']].set(
        data['env_features'] @ params['env_w'] + params['env_b'])
    emb = jnp.pad(emb, ((0, 0), (0, F_PAD - feature_dim)))   # lane-dense slab

    pooled_pad = fused_gnn_residual_pool(a_norm_pad, emb, gcn_padded, pool_mat_pad)
    return pooled_pad[:num_graphs, :gnn_hidden_dim]


# -------------------------- parameters & reference --------------------------

def init_params(key, feature_dim=8, gnn_hidden_dim=32):
    """Deterministic synthetic parameters (Linear weights stored as (in, out)).
    Embedding input widths follow the module: ev=6, cs=4, tr=2, env=5."""
    ks = jax.random.split(key, 14)

    def lin(kw, kb, fan_in, fan_out):
        w = 0.1 * jax.random.normal(kw, (fan_in, fan_out), jnp.float32)
        b = 0.1 * jax.random.normal(kb, (1, fan_out), jnp.float32)
        return w, b

    p = {}
    p['ev_w'], p['ev_b'] = lin(ks[0], ks[1], 6, feature_dim)
    p['cs_w'], p['cs_b'] = lin(ks[2], ks[3], 4, feature_dim)
    p['tr_w'], p['tr_b'] = lin(ks[4], ks[5], 2, feature_dim)
    p['env_w'], p['env_b'] = lin(ks[6], ks[7], 5, feature_dim)
    p['g1_w'], p['g1_b'] = lin(ks[8], ks[9], feature_dim, gnn_hidden_dim)
    p['g2_w'], p['g2_b'] = lin(ks[10], ks[11], gnn_hidden_dim, 2 * gnn_hidden_dim)
    p['g3_w'], p['g3_b'] = lin(ks[12], ks[13], 2 * gnn_hidden_dim, gnn_hidden_dim)
    return p


def reference_forward(params, data, sample_node_length, feature_dim):
    """Pure-jnp f32 replica of the PyTorch forward (for validation)."""
    ev, cs, tr, env = (data['ev_features'], data['cs_features'],
                       data['tr_features'], data['env_features'])
    total_nodes = ev.shape[0] + cs.shape[0] + tr.shape[0] + env.shape[0]
    emb = jnp.zeros((total_nodes, feature_dim), jnp.float32)
    emb = emb.at[data['ev_indexes']].set(ev @ params['ev_w'] + params['ev_b'])
    emb = emb.at[data['cs_indexes']].set(cs @ params['cs_w'] + params['cs_b'])
    emb = emb.at[data['tr_indexes']].set(tr @ params['tr_w'] + params['tr_b'])
    emb = emb.at[data['env_indexes']].set(env @ params['env_w'] + params['env_b'])
    a = dense_gcn_norm(data['edge_index'], total_nodes)
    x1 = a @ (emb @ params['g1_w']) + params['g1_b']
    x = jnp.maximum(x1, 0.0)
    x = jnp.maximum(a @ (x @ params['g2_w']) + params['g2_b'], 0.0)
    x = jnp.maximum(a @ (x @ params['g3_w']) + params['g3_b'], 0.0)
    x = x + x1
    out, c = [], 0
    for length in sample_node_length:
        out.append(x[c:c + length].mean(axis=0))
        c += length
    return jnp.stack(out)


# --------------------------------- driver -----------------------------------

if __name__ == "__main__":
    feature_dim = 8
    gnn_hidden_dim = 32

    key = jax.random.PRNGKey(0)
    kp, kev, kcs, ktr, kenv = jax.random.split(key, 5)
    params = init_params(kp, feature_dim, gnn_hidden_dim)
    gcn_padded = pad_gcn_params(params)

    # Two graph samples, 5 nodes each: [ev0, ev1, cs0, tr0, env0] per sample.
    ev_features = jax.random.normal(kev, (4, 6), jnp.float32)
    cs_features = jax.random.normal(kcs, (2, 4), jnp.float32)
    tr_features = jax.random.normal(ktr, (2, 2), jnp.float32)
    env_features = jax.random.normal(kenv, (2, 5), jnp.float32)

    ev_indexes = jnp.array([0, 1, 5, 6], jnp.int32)
    cs_indexes = jnp.array([2, 7], jnp.int32)
    tr_indexes = jnp.array([3, 8], jnp.int32)
    env_indexes = jnp.array([4, 9], jnp.int32)

    # Per-sample bidirectional edges (src row, dst row), sample 1 offset by 5.
    base_edges = np.array(
        [[0, 2], [2, 0], [1, 2], [2, 1], [3, 2],
         [2, 3], [4, 0], [0, 4], [4, 2], [2, 4]], dtype=np.int32)
    edges = np.concatenate([base_edges, base_edges + 5], axis=0)   # (20, 2)
    edge_index = jnp.asarray(edges.T)                              # (2, 20)

    sample_node_length = [5, 5]
    total_nodes = 10
    num_graphs = len(sample_node_length)

    data = {
        'ev_features': ev_features,
        'cs_features': cs_features,
        'tr_features': tr_features,
        'env_features': env_features,
        'edge_index': edge_index,
        'ev_indexes': ev_indexes,
        'cs_indexes': cs_indexes,
        'tr_indexes': tr_indexes,
        'env_indexes': env_indexes,
    }

    # Hoisted, once-per-topology precompute of A_norm (bf16, padded) + pool_mat.
    a_norm_pad, pool_mat_pad = prepare_graph(edge_index, total_nodes,
                                             sample_node_length)

    pooled = gnn_residual_feature_extractor_forward(
        params, gcn_padded, data, a_norm_pad, pool_mat_pad,
        feature_dim=feature_dim, gnn_hidden_dim=gnn_hidden_dim,
        num_graphs=num_graphs)
    pooled = jax.block_until_ready(pooled)

    assert pooled.shape == (num_graphs, gnn_hidden_dim)
    assert bool(jnp.all(jnp.isfinite(pooled)))

    ref = reference_forward(params, data, sample_node_length, feature_dim)
    np.testing.assert_allclose(np.asarray(pooled), np.asarray(ref),
                               rtol=1e-1, atol=2e-2)

    print("KERNEL_OK")
</pallas_src>

<mosaic_0001>
module attributes {stable_mosaic.version = 11 : i64} {
  func.func @_fused_gnn_kernel(%arg0: memref<16x16xbf16, #tpu.memory_space<vmem>>, %arg1: memref<16x128xf32, #tpu.memory_space<vmem>>, %arg2: memref<128x128xf32, #tpu.memory_space<vmem>>, %arg3: memref<1x128xf32, #tpu.memory_space<vmem>>, %arg4: memref<128x128xf32, #tpu.memory_space<vmem>>, %arg5: memref<1x128xf32, #tpu.memory_space<vmem>>, %arg6: memref<128x128xf32, #tpu.memory_space<vmem>>, %arg7: memref<1x128xf32, #tpu.memory_space<vmem>>, %arg8: memref<8x16xf32, #tpu.memory_space<vmem>>, %arg9: memref<8x128xf32, #tpu.memory_space<vmem>>) attributes {dimension_semantics = [], scalar_prefetch = 0 : i64, scratch_operands = 0 : i64, tpu.core_type = #tpu.core_type<tc>} {
    %c0 = arith.constant 0 : index
    %c0_0 = arith.constant 0 : index
    %0 = vector.load %arg0[%c0, %c0_0] : memref<16x16xbf16, #tpu.memory_space<vmem>>, vector<16x16xbf16>
    %c0_1 = arith.constant 0 : index
    %c0_2 = arith.constant 0 : index
    %1 = vector.load %arg1[%c0_1, %c0_2] : memref<16x128xf32, #tpu.memory_space<vmem>>, vector<16x128xf32>
    %2 = arith.truncf %1 : vector<16x128xf32> to vector<16x128xbf16>
    %cst = arith.constant dense<0.000000e+00> : vector<16x128xf32>
    %3 = tpu.matmul %0, %2, %cst {dimension_numbers = #tpu.dot_dimension_numbers<[1], [0], [0], [1], [0, 0, 1, 1], [], []>} : vector<16x16xbf16>, vector<16x128xbf16>, vector<16x128xf32> -> vector<16x128xf32>
    %4 = arith.truncf %3 : vector<16x128xf32> to vector<16x128xbf16>
    %c0_3 = arith.constant 0 : index
    %c0_4 = arith.constant 0 : index
    %5 = vector.load %arg2[%c0_3, %c0_4] : memref<128x128xf32, #tpu.memory_space<vmem>>, vector<128x128xf32>
    %6 = arith.truncf %5 : vector<128x128xf32> to vector<128x128xbf16>
    %cst_5 = arith.constant dense<0.000000e+00> : vector<16x128xf32>
    %7 = tpu.matmul %4, %6, %cst_5 {dimension_numbers = #tpu.dot_dimension_numbers<[1], [0], [0], [1], [0, 0, 1, 1], [], []>} : vector<16x128xbf16>, vector<128x128xbf16>, vector<16x128xf32> -> vector<16x128xf32>
    %c0_6 = arith.constant 0 : index
    %c0_7 = arith.constant 0 : index
    %8 = vector.load %arg3[%c0_6, %c0_7] : memref<1x128xf32, #tpu.memory_space<vmem>>, vector<1x128xf32>
    %9 = vector.broadcast %8 : vector<1x128xf32> to vector<16x128xf32>
    %10 = arith.addf %7, %9 : vector<16x128xf32>
    %cst_8 = arith.constant 0.000000e+00 : f32
    %11 = vector.broadcast %cst_8 : f32 to vector<16x128xf32>
    %12 = arith.maximumf %10, %11 : vector<16x128xf32>
    %13 = arith.truncf %12 : vector<16x128xf32> to vector<16x128xbf16>
    %cst_9 = arith.constant dense<0.000000e+00> : vector<16x128xf32>
    %14 = tpu.matmul %0, %13, %cst_9 {dimension_numbers = #tpu.dot_dimension_numbers<[1], [0], [0], [1], [0, 0, 1, 1], [], []>} : vector<16x16xbf16>, vector<16x128xbf16>, vector<16x128xf32> -> vector<16x128xf32>
    %15 = arith.truncf %14 : vector<16x128xf32> to vector<16x128xbf16>
    %c0_10 = arith.constant 0 : index
    %c0_11 = arith.constant 0 : index
    %16 = vector.load %arg4[%c0_10, %c0_11] : memref<128x128xf32, #tpu.memory_space<vmem>>, vector<128x128xf32>
    %17 = arith.truncf %16 : vector<128x128xf32> to vector<128x128xbf16>
    %cst_12 = arith.constant dense<0.000000e+00> : vector<16x128xf32>
    %18 = tpu.matmul %15, %17, %cst_12 {dimension_numbers = #tpu.dot_dimension_numbers<[1], [0], [0], [1], [0, 0, 1, 1], [], []>} : vector<16x128xbf16>, vector<128x128xbf16>, vector<16x128xf32> -> vector<16x128xf32>
    %c0_13 = arith.constant 0 : index
    %c0_14 = arith.constant 0 : index
    %19 = vector.load %arg5[%c0_13, %c0_14] : memref<1x128xf32, #tpu.memory_space<vmem>>, vector<1x128xf32>
    %20 = vector.broadcast %19 : vector<1x128xf32> to vector<16x128xf32>
    %21 = arith.addf %18, %20 : vector<16x128xf32>
    %cst_15 = arith.constant 0.000000e+00 : f32
    %22 = vector.broadcast %cst_15 : f32 to vector<16x128xf32>
    %23 = arith.maximumf %21, %22 : vector<16x128xf32>
    %24 = arith.truncf %23 : vector<16x128xf32> to vector<16x128xbf16>
    %c0_16 = arith.constant 0 : index
    %c0_17 = arith.constant 0 : index
    %25 = vector.load %arg6[%c0_16, %c0_17] : memref<128x128xf32, #tpu.memory_space<vmem>>, vector<128x128xf32>
    %26 = arith.truncf %25 : vector<128x128xf32> to vector<128x128xbf16>
    %cst_18 = arith.constant dense<0.000000e+00> : vector<16x128xf32>
    %27 = tpu.matmul %24, %26, %cst_18 {dimension_numbers = #tpu.dot_dimension_numbers<[1], [0], [0], [1], [0, 0, 1, 1], [], []>} : vector<16x128xbf16>, vector<128x128xbf16>, vector<16x128xf32> -> vector<16x128xf32>
    %28 = arith.truncf %27 : vector<16x128xf32> to vector<16x128xbf16>
    %cst_19 = arith.constant dense<0.000000e+00> : vector<16x128xf32>
    %29 = tpu.matmul %0, %28, %cst_19 {dimension_numbers = #tpu.dot_dimension_numbers<[1], [0], [0], [1], [0, 0, 1, 1], [], []>} : vector<16x16xbf16>, vector<16x128xbf16>, vector<16x128xf32> -> vector<16x128xf32>
    %c0_20 = arith.constant 0 : index
    %c0_21 = arith.constant 0 : index
    %30 = vector.load %arg7[%c0_20, %c0_21] : memref<1x128xf32, #tpu.memory_space<vmem>>, vector<1x128xf32>
    %31 = vector.broadcast %30 : vector<1x128xf32> to vector<16x128xf32>
    %32 = arith.addf %29, %31 : vector<16x128xf32>
    %cst_22 = arith.constant 0.000000e+00 : f32
    %33 = vector.broadcast %cst_22 : f32 to vector<16x128xf32>
    %34 = arith.maximumf %32, %33 : vector<16x128xf32>
    %35 = arith.addf %34, %10 : vector<16x128xf32>
    %c0_23 = arith.constant 0 : index
    %c0_24 = arith.constant 0 : index
    %36 = vector.load %arg8[%c0_23, %c0_24] : memref<8x16xf32, #tpu.memory_space<vmem>>, vector<8x16xf32>
    %cst_25 = arith.constant dense<0.000000e+00> : vector<8x128xf32>
    %37 = tpu.matmul %36, %35, %cst_25 {dimension_numbers = #tpu.dot_dimension_numbers<[1], [0], [0], [1], [0, 0, 1, 1], [], []>} : vector<8x16xf32>, vector<16x128xf32>, vector<8x128xf32> -> vector<8x128xf32>
    %c0_26 = arith.constant 0 : index
    %c0_27 = arith.constant 0 : index
    %38 = vector.load %arg9[%c0_26, %c0_27] : memref<8x128xf32, #tpu.memory_space<vmem>>, vector<8x128xf32>
    tpu.vector_store %arg9[%c0_26, %c0_27], %37 {strides = array<i32>} : memref<8x128xf32, #tpu.memory_space<vmem>>, vector<8x128xf32>,
    return
  }
}

</mosaic_0001>

<llo_original>
// kernel: gnn_residual_feature_extractor_forward.1
$region0: #{gnn_residual_feature_extractor_forward.1}
  #allocation0 [shape = 'u32[]', space=smem, size = 0x4, offset = 0x4, fixed_abs, tag = 'smem constant byte address 0x4 - core index']
  #allocation1 [shape = 'u32[144,128]{1,0:T(1,128)}', space=vmem, size = 0x12000, scoped, tag = 'internal scratch']
  %s0 = inlined_call_operand.vmem [shape: bf16[16,16], index: 0, kind: input, shape index: {}]
  %s1 = inlined_call_operand.vmem [shape: f32[16,128], index: 1, kind: input, shape index: {}]
  %s2 = inlined_call_operand.vmem [shape: f32[128,128], index: 2, kind: input, shape index: {}]
  %s3 = inlined_call_operand.hbm [shape: f32[1,128], index: 3, kind: input, shape index: {}]
  %s4 = inlined_call_operand.vmem [shape: f32[128,128], index: 4, kind: input, shape index: {}]
  %s5 = inlined_call_operand.hbm [shape: f32[1,128], index: 5, kind: input, shape index: {}]
  %s6 = inlined_call_operand.hbm [shape: f32[128,128], index: 6, kind: input, shape index: {}]
  %s7 = inlined_call_operand.hbm [shape: f32[1,128], index: 7, kind: input, shape index: {}]
  %s8 = inlined_call_operand.hbm [shape: f32[8,16], index: 8, kind: input, shape index: {}]
  %s9 = inlined_call_operand.vmem [shape: f32[8,128], index: 9, kind: output, shape index: {}]
  %s10 = sld [smem:[#allocation0]]
  $region66: #{gnn_residual_feature_extractor_forward.1} parent=0
    _
  %s12 = ssub.s32 1, %s10
  %s13 = scalar_select 0, %s12, %s10
  $region1: #{gnn_residual_feature_extractor_forward.1} parent=0
    #allocation2 [shape = 'u8[512]{0}', space=vmem, size = 0x400, scoped, tag = 'input window, operand 3, single buffered']
    #allocation3 [shape = 's32[1]{0}', space=sflag, size = 0x4, scoped, tag = 'scoped memory for gnn_residual_feature_extractor_forward.1']
    #allocation4 [shape = 'u8[512]{0}', space=vmem, size = 0x400, scoped, tag = 'input window, operand 5, single buffered']
    #allocation5 [shape = 's32[1]{0}', space=sflag, size = 0x4, scoped, tag = 'scoped memory for gnn_residual_feature_extractor_forward.1']
    #allocation6 [shape = 'u8[65536]{0}', space=vmem, size = 0x10000, scoped, tag = 'input window, operand 6, single buffered']
    #allocation7 [shape = 'u8[512]{0}', space=vmem, size = 0x400, scoped, tag = 'input window, operand 7, single buffered']
    #allocation8 [shape = 's32[1]{0}', space=sflag, size = 0x4, scoped, tag = 'scoped memory for gnn_residual_feature_extractor_forward.1']
    #allocation9 [shape = 'u8[4096]{0}', space=vmem, size = 0x1000, scoped, tag = 'input window, operand 8, single buffered']
    %14 = vsyncpa [#allocation3], 0
    %15 = vsyncpa [#allocation5], 0
    %16 = vsyncpa [#allocation8], 0
    // Predicated region
    $region2: #{gnn_residual_feature_extractor_forward.1} parent=1 // pred_check
      _
    $region3: #{gnn_residual_feature_extractor_forward.1} parent=1 // pred_check_branch
      %18 = sbr.rel (0) target = $region5
    $region4: #{gnn_residual_feature_extractor_forward.1} parent=1 // pred_region
      _
    $region5: #{gnn_residual_feature_extractor_forward.1} parent=1 // pred_fallthru
      _
    // Predicated region
    $region6: #{gnn_residual_feature_extractor_forward.1} parent=1 // pred_check
      _
    $region7: #{gnn_residual_feature_extractor_forward.1} parent=1 // pred_check_branch
      %20 = sbr.rel (0) target = $region9
    $region8: #{gnn_residual_feature_extractor_forward.1} parent=1 // pred_region
      _
    $region9: #{gnn_residual_feature_extractor_forward.1} parent=1 // pred_fallthru
      _
    // Predicated region
    $region10: #{gnn_residual_feature_extractor_forward.1} parent=1 // pred_check
      _
    $region11: #{gnn_residual_feature_extractor_forward.1} parent=1 // pred_check_branch
      %22 = sbr.rel (0) target = $region13
    $region12: #{gnn_residual_feature_extractor_forward.1} parent=1 // pred_region
      _
    $region13: #{gnn_residual_feature_extractor_forward.1} parent=1 // pred_fallthru
      _
    // Predicated region
    $region14: #{gnn_residual_feature_extractor_forward.1} parent=1 // pred_check
      _
    $region15: #{gnn_residual_feature_extractor_forward.1} parent=1 // pred_check_branch
      %24 = sbr.rel (0) target = $region17
    $region16: #{gnn_residual_feature_extractor_forward.1} parent=1 // pred_region
      %s26 = ssub.s32 16, 16
      %27 = vsyncadd [#allocation3], %s26
      %s29 = sshll.u32 [#allocation2], 4
      %s30 = int_to_ptr.vmem [resolvable:$true] %s29
      %32 = dma.hbm_to_vmem [thread:$0]  %s3, 16, %s30, [#allocation3]
    $region17: #{gnn_residual_feature_extractor_forward.1} parent=1 // pred_fallthru
      _
    // Predicated region
    $region18: #{gnn_residual_feature_extractor_forward.1} parent=1 // pred_check
      _
    $region19: #{gnn_residual_feature_extractor_forward.1} parent=1 // pred_check_branch
      %34 = sbr.rel (0) target = $region21
    $region20: #{gnn_residual_feature_extractor_forward.1} parent=1 // pred_region
      _
    $region21: #{gnn_residual_feature_extractor_forward.1} parent=1 // pred_fallthru
      _
    // Predicated region
    $region22: #{gnn_residual_feature_extractor_forward.1} parent=1 // pred_check
      _
    $region23: #{gnn_residual_feature_extractor_forward.1} parent=1 // pred_check_branch
      %36 = sbr.rel (0) target = $region25
    $region24: #{gnn_residual_feature_extractor_forward.1} parent=1 // pred_region
      %s38 = ssub.s32 16, 16
      %39 = vsyncadd [#allocation5], %s38
      %s41 = sshll.u32 [#allocation4], 4
      %s42 = int_to_ptr.vmem [resolvable:$true] %s41
      %44 = dma.hbm_to_vmem [thread:$0]  %s5, 16, %s42, [#allocation5]
    $region25: #{gnn_residual_feature_extractor_forward.1} parent=1 // pred_fallthru
      _
    // Predicated region
    $region26: #{gnn_residual_feature_extractor_forward.1} parent=1 // pred_check
      _
    $region27: #{gnn_residual_feature_extractor_forward.1} parent=1 // pred_check_branch
      %46 = sbr.rel (0) target = $region29
    $region28: #{gnn_residual_feature_extractor_forward.1} parent=1 // pred_region
      %s48 = ssub.s32 2048, 2048
      %49 = vsyncadd [#allocation5], %s48
      %s50 = sshll.u32 [#allocation6], 4
      %s51 = int_to_ptr.vmem [resolvable:$true] %s50
      %56 = dma.hbm_to_vmem [thread:$0]  %s6, 2048, %s51, [#allocation5], 128, 128, 8
    $region29: #{gnn_residual_feature_extractor_forward.1} parent=1 // pred_fallthru
      _
    // Predicated region
    $region30: #{gnn_residual_feature_extractor_forward.1} parent=1 // pred_check
      _
    $region31: #{gnn_residual_feature_extractor_forward.1} parent=1 // pred_check_branch
      %58 = sbr.rel (0) target = $region33
    $region32: #{gnn_residual_feature_extractor_forward.1} parent=1 // pred_region
      %s60 = ssub.s32 16, 16
      %61 = vsyncadd [#allocation8], %s60
      %s63 = sshll.u32 [#allocation7], 4
      %s64 = int_to_ptr.vmem [resolvable:$true] %s63
      %66 = dma.hbm_to_vmem [thread:$0]  %s7, 16, %s64, [#allocation8]
    $region33: #{gnn_residual_feature_extractor_forward.1} parent=1 // pred_fallthru
      _
    // Predicated region
    $region34: #{gnn_residual_feature_extractor_forward.1} parent=1 // pred_check
      _
    $region35: #{gnn_residual_feature_extractor_forward.1} parent=1 // pred_check_branch
      %68 = sbr.rel (0) target = $region37
    $region36: #{gnn_residual_feature_extractor_forward.1} parent=1 // pred_region
      %s70 = ssub.s32 128, 128
      %71 = vsyncadd [#allocation8], %s70
      %s73 = sshll.u32 [#allocation9], 4
      %s74 = int_to_ptr.vmem [resolvable:$true] %s73
      %76 = dma.hbm_to_vmem [thread:$0]  %s8, 128, %s74, [#allocation8]
    $region37: #{gnn_residual_feature_extractor_forward.1} parent=1 // pred_fallthru
      _
    // Predicated region
    $region38: #{gnn_residual_feature_extractor_forward.1} parent=1 // pred_check
      _
    $region39: #{gnn_residual_feature_extractor_forward.1} parent=1 // pred_check_branch
      %78 = sbr.rel (0) target = $region41
    $region40: #{gnn_residual_feature_extractor_forward.1} parent=1 // pred_region
      %79 = dma.done [#allocation3], 16
    $region41: #{gnn_residual_feature_extractor_forward.1} parent=1 // pred_fallthru
      _
    // Predicated region
    $region42: #{gnn_residual_feature_extractor_forward.1} parent=1 // pred_check
      _
    $region43: #{gnn_residual_feature_extractor_forward.1} parent=1 // pred_check_branch
      %81 = sbr.rel (0) target = $region45
    $region44: #{gnn_residual_feature_extractor_forward.1} parent=1 // pred_region
      %82 = dma.done [#allocation5], 16
    $region45: #{gnn_residual_feature_extractor_forward.1} parent=1 // pred_fallthru
      _
    // Predicated region
    $region46: #{gnn_residual_feature_extractor_forward.1} parent=1 // pred_check
      _
    $region47: #{gnn_residual_feature_extractor_forward.1} parent=1 // pred_check_branch
      %84 = sbr.rel (0) target = $region49
    $region48: #{gnn_residual_feature_extractor_forward.1} parent=1 // pred_region
      %85 = dma.done [#allocation5], 2048
    $region49: #{gnn_residual_feature_extractor_forward.1} parent=1 // pred_fallthru
      _
    // Predicated region
    $region50: #{gnn_residual_feature_extractor_forward.1} parent=1 // pred_check
      _
    $region51: #{gnn_residual_feature_extractor_forward.1} parent=1 // pred_check_branch
      %87 = sbr.rel (0) target = $region53
    $region52: #{gnn_residual_feature_extractor_forward.1} parent=1 // pred_region
      %88 = dma.done [#allocation8], 16
    $region53: #{gnn_residual_feature_extractor_forward.1} parent=1 // pred_fallthru
      _
    // Predicated region
    $region54: #{gnn_residual_feature_extractor_forward.1} parent=1 // pred_check
      _
    $region55: #{gnn_residual_feature_extractor_forward.1} parent=1 // pred_check_branch
      %90 = sbr.rel (0) target = $region57
    $region56: #{gnn_residual_feature_extractor_forward.1} parent=1 // pred_region
      %91 = dma.done [#allocation8], 128
    $region57: #{gnn_residual_feature_extractor_forward.1} parent=1 // pred_fallthru
      _
    %v93 = vld [vmem:[%s0] sm:$0xf]
    %v94 = vld [vmem:[%s0 + $0x4] sm:$0xf]
    %v95 = vld [vmem:[%s1] sm:$0xff]
    %v96 = vld [vmem:[%s1 + $0x8] sm:$0xff]
    %v97 = vpack.c.bf16 %v96, %v95
    %v100 = vunpack.c.l.b16 %v93
    %v101 = vunpack.c.l.b16 %v94
    %v102 = vpack.c.b16 %v101, %v100
    %vm103 = vcmask 130048
    %v105 = vsel %vm103, %v102, 0
    %107 = vmatprep.subr.bf16.mxu0 0
    %108 = vmatpush1.bf16.msra.mxu0 %v97
    %109 = vmatprep.subr.bf16.mxu0 0
    %110 = vmatpush1.bf16.msra.mxu0 0
    %111 = vmatprep.subr.bf16.mxu0 0
    %112 = vmatpush1.bf16.msra.mxu0 0
    %113 = vmatprep.subr.bf16.mxu0 0
    %114 = vmatpush1.bf16.msra.mxu0 0
    %115 = vmatprep.subr.bf16.mxu0 0
    %116 = vmatpush1.bf16.msra.mxu0 0
    %117 = vmatprep.subr.bf16.mxu0 0
    %118 = vmatpush1.bf16.msra.mxu0 0
    %119 = vmatprep.subr.bf16.mxu0 0
    %120 = vmatpush1.bf16.msra.mxu0 0
    %121 = vmatprep.subr.bf16.mxu0 0
    %122 = vmatpush1.bf16.msra.mxu0 0
    %123 = vmatprep.subr.bf16.mxu0 0
    %124 = vmatpush1.bf16.msra.mxu0 0
    %125 = vmatprep.subr.bf16.mxu0 0
    %126 = vmatpush1.bf16.msra.mxu0 0
    %127 = vmatprep.subr.bf16.mxu0 0
    %128 = vmatpush1.bf16.msra.mxu0 0
    %129 = vmatprep.subr.bf16.mxu0 0
    %130 = vmatpush1.bf16.msra.mxu0 0
    %131 = vmatprep.subr.bf16.mxu0 0
    %132 = vmatpush1.bf16.msra.mxu0 0
    %133 = vmatprep.subr.bf16.mxu0 0
    %134 = vmatpush1.bf16.msra.mxu0 0
    %135 = vmatprep.subr.bf16.mxu0 0
    %136 = vmatpush1.bf16.msra.mxu0 0
    %137 = vmatprep.subr.bf16.mxu0 0
    %138 = vmatpush1.bf16.msra.mxu0 0
    %139 = vmatprep.mubr.bf16.mxu0 0
    %140 = vmatmul.mubr.bf16.gmra.mrb[0].mxu0 %v105
    %v141 = vpop.f32.mrb[0].mxu0
    %v142 = vadd.f32 0.0, %v141
    %v143 = vpop.f32.mrb[0].mxu0
    %v144 = vpop.f32.mrb[0].mxu0
    %v145 = vadd.f32 0.0, %v144
    %v146 = vpop.f32.mrb[0].mxu0
    %147 = vdwg.mxu0
    %v148 = vpack.c.bf16 %v145, %v142
    %v149 = vld [vmem:[%s2] sm:$0xff]
    %v150 = vld [vmem:[%s2 + $0x8] sm:$0xff]
    %v151 = vld [vmem:[%s2 + $0x10] sm:$0xff]
    %v152 = vld [vmem:[%s2 + $0x18] sm:$0xff]
    %v153 = vld [vmem:[%s2 + $0x20] sm:$0xff]
    %v154 = vld [vmem:[%s2 + $0x28] sm:$0xff]
    %v155 = vld [vmem:[%s2 + $0x30] sm:$0xff]
    %v156 = vld [vmem:[%s2 + $0x38] sm:$0xff]
    %v157 = vld [vmem:[%s2 + $0x40] sm:$0xff]
    %v158 = vld [vmem:[%s2 + $0x48] sm:$0xff]
    %v159 = vld [vmem:[%s2 + $0x50] sm:$0xff]
    %v160 = vld [vmem:[%s2 + $0x58] sm:$0xff]
    %v161 = vld [vmem:[%s2 + $0x60] sm:$0xff]
    %v162 = vld [vmem:[%s2 + $0x68] sm:$0xff]
    %v163 = vld [vmem:[%s2 + $0x70] sm:$0xff]
    %v164 = vld [vmem:[%s2 + $0x78] sm:$0xff]
    %v165 = vpack.c.bf16 %v150, %v149
    %v166 = vpack.c.bf16 %v152, %v151
    %v167 = vpack.c.bf16 %v154, %v153
    %v168 = vpack.c.bf16 %v156, %v155
    %v169 = vpack.c.bf16 %v158, %v157
    %v170 = vpack.c.bf16 %v160, %v159
    %v171 = vpack.c.bf16 %v162, %v161
    %v172 = vpack.c.bf16 %v164, %v163
    %v173 = vld [vmem:[#allocation2] sm:$0x1]
    %v175 = vlaneseq
    %v176 = vshrl.u32 %v175, 7
    %v177 = vsub.s32 0, %v176
    %v178 = vrot.slane %v173, %v177
    %180 = vmatprep.subr.bf16.mxu0 0
    %181 = vmatpush1.bf16.msra.mxu0 %v165
    %182 = vmatprep.subr.bf16.mxu0 0
    %183 = vmatpush1.bf16.msra.mxu0 %v166
    %184 = vmatprep.subr.bf16.mxu0 0
    %185 = vmatpush1.bf16.msra.mxu0 %v167
    %186 = vmatprep.subr.bf16.mxu0 0
    %187 = vmatpush1.bf16.msra.mxu0 %v168
    %188 = vmatprep.subr.bf16.mxu0 0
    %189 = vmatpush1.bf16.msra.mxu0 %v169
    %190 = vmatprep.subr.bf16.mxu0 0
    %191 = vmatpush1.bf16.msra.mxu0 %v170
    %192 = vmatprep.subr.bf16.mxu0 0
    %193 = vmatpush1.bf16.msra.mxu0 %v171
    %194 = vmatprep.subr.bf16.mxu0 0
    %195 = vmatpush1.bf16.msra.mxu0 %v172
    %196 = vmatprep.subr.bf16.mxu0 0
    %197 = vmatpush1.bf16.msra.mxu0 0
    %198 = vmatprep.subr.bf16.mxu0 0
    %199 = vmatpush1.bf16.msra.mxu0 0
    %200 = vmatprep.subr.bf16.mxu0 0
    %201 = vmatpush1.bf16.msra.mxu0 0
    %202 = vmatprep.subr.bf16.mxu0 0
    %203 = vmatpush1.bf16.msra.mxu0 0
    %204 = vmatprep.subr.bf16.mxu0 0
    %205 = vmatpush1.bf16.msra.mxu0 0
    %206 = vmatprep.subr.bf16.mxu0 0
    %207 = vmatpush1.bf16.msra.mxu0 0
    %208 = vmatprep.subr.bf16.mxu0 0
    %209 = vmatpush1.bf16.msra.mxu0 0
    %210 = vmatprep.subr.bf16.mxu0 0
    %211 = vmatpush1.bf16.msra.mxu0 0
    %212 = vmatprep.mubr.bf16.mxu0 0
    %213 = vmatmul.mubr.bf16.gmra.mrb[0].mxu0 %v148
    %v214 = vpop.f32.mrb[0].mxu0
    %v215 = vadd.f32 %v178, %v214
    %v216 = vpop.f32.mrb[0].mxu0
    %v217 = vpop.f32.mrb[0].mxu0
    %v218 = vadd.f32 %v178, %v217
    %v219 = vpop.f32.mrb[0].mxu0
    %220 = vdwg.mxu0
    %v221 = vmax.f32 %v215, 0.0
    %v222 = vmax.f32 %v218, 0.0
    %v223 = vpack.c.bf16 %v222, %v221
    %224 = vmatprep.subr.bf16.mxu0 0
    %225 = vmatpush1.bf16.msra.mxu0 %v223
    %226 = vmatprep.subr.bf16.mxu0 0
    %227 = vmatpush1.bf16.msra.mxu0 0
    %228 = vmatprep.subr.bf16.mxu0 0
    %229 = vmatpush1.bf16.msra.mxu0 0
    %230 = vmatprep.subr.bf16.mxu0 0
    %231 = vmatpush1.bf16.msra.mxu0 0
    %232 = vmatprep.subr.bf16.mxu0 0
    %233 = vmatpush1.bf16.msra.mxu0 0
    %234 = vmatprep.subr.bf16.mxu0 0
    %235 = vmatpush1.bf16.msra.mxu0 0
    %236 = vmatprep.subr.bf16.mxu0 0
    %237 = vmatpush1.bf16.msra.mxu0 0
    %238 = vmatprep.subr.bf16.mxu0 0
    %239 = vmatpush1.bf16.msra.mxu0 0
    %240 = vmatprep.subr.bf16.mxu0 0
    %241 = vmatpush1.bf16.msra.mxu0 0
    %242 = vmatprep.subr.bf16.mxu0 0
    %243 = vmatpush1.bf16.msra.mxu0 0
    %244 = vmatprep.subr.bf16.mxu0 0
    %245 = vmatpush1.bf16.msra.mxu0 0
    %246 = vmatprep.subr.bf16.mxu0 0
    %247 = vmatpush1.bf16.msra.mxu0 0
    %248 = vmatprep.subr.bf16.mxu0 0
    %249 = vmatpush1.bf16.msra.mxu0 0
    %250 = vmatprep.subr.bf16.mxu0 0
    %251 = vmatpush1.bf16.msra.mxu0 0
    %252 = vmatprep.subr.bf16.mxu0 0
    %253 = vmatpush1.bf16.msra.mxu0 0
    %254 = vmatprep.subr.bf16.mxu0 0
    %255 = vmatpush1.bf16.msra.mxu0 0
    %256 = vmatprep.mubr.bf16.mxu0 0
    %257 = vmatmul.mubr.bf16.gmra.mrb[0].mxu0 %v105
    %v258 = vpop.f32.mrb[0].mxu0
    %v259 = vadd.f32 0.0, %v258
    %v260 = vpop.f32.mrb[0].mxu0
    %v261 = vpop.f32.mrb[0].mxu0
    %v262 = vadd.f32 0.0, %v261
    %v263 = vpop.f32.mrb[0].mxu0
    %264 = vdwg.mxu0
    %v265 = vpack.c.bf16 %v262, %v259
    %v266 = vld [vmem:[%s4] sm:$0xff]
    %v267 = vld [vmem:[%s4 + $0x8] sm:$0xff]
    %v268 = vld [vmem:[%s4 + $0x10] sm:$0xff]
    %v269 = vld [vmem:[%s4 + $0x18] sm:$0xff]
    %v270 = vld [vmem:[%s4 + $0x20] sm:$0xff]
    %v271 = vld [vmem:[%s4 + $0x28] sm:$0xff]
    %v272 = vld [vmem:[%s4 + $0x30] sm:$0xff]
    %v273 = vld [vmem:[%s4 + $0x38] sm:$0xff]
    %v274 = vld [vmem:[%s4 + $0x40] sm:$0xff]
    %v275 = vld [vmem:[%s4 + $0x48] sm:$0xff]
    %v276 = vld [vmem:[%s4 + $0x50] sm:$0xff]
    %v277 = vld [vmem:[%s4 + $0x58] sm:$0xff]
    %v278 = vld [vmem:[%s4 + $0x60] sm:$0xff]
    %v279 = vld [vmem:[%s4 + $0x68] sm:$0xff]
    %v280 = vld [vmem:[%s4 + $0x70] sm:$0xff]
    %v281 = vld [vmem:[%s4 + $0x78] sm:$0xff]
    %v282 = vpack.c.bf16 %v267, %v266
    %v283 = vpack.c.bf16 %v269, %v268
    %v284 = vpack.c.bf16 %v271, %v270
    %v285 = vpack.c.bf16 %v273, %v272
    %v286 = vpack.c.bf16 %v275, %v274
    %v287 = vpack.c.bf16 %v277, %v276
    %v288 = vpack.c.bf16 %v279, %v278
    %v289 = vpack.c.bf16 %v281, %v280
    %v290 = vld [vmem:[#allocation4] sm:$0x1]
    %v292 = vlaneseq
    %v293 = vshrl.u32 %v292, 7
    %v294 = vsub.s32 0, %v293
    %v295 = vrot.slane %v290, %v294
    %297 = vmatprep.subr.bf16.mxu0 0
    %298 = vmatpush1.bf16.msra.mxu0 %v282
    %299 = vmatprep.subr.bf16.mxu0 0
    %300 = vmatpush1.bf16.msra.mxu0 %v283
    %301 = vmatprep.subr.bf16.mxu0 0
    %302 = vmatpush1.bf16.msra.mxu0 %v284
    %303 = vmatprep.subr.bf16.mxu0 0
    %304 = vmatpush1.bf16.msra.mxu0 %v285
    %305 = vmatprep.subr.bf16.mxu0 0
    %306 = vmatpush1.bf16.msra.mxu0 %v286
    %307 = vmatprep.subr.bf16.mxu0 0
    %308 = vmatpush1.bf16.msra.mxu0 %v287
    %309 = vmatprep.subr.bf16.mxu0 0
    %310 = vmatpush1.bf16.msra.mxu0 %v288
    %311 = vmatprep.subr.bf16.mxu0 0
    %312 = vmatpush1.bf16.msra.mxu0 %v289
    %313 = vmatprep.subr.bf16.mxu0 0
    %314 = vmatpush1.bf16.msra.mxu0 0
    %315 = vmatprep.subr.bf16.mxu0 0
    %316 = vmatpush1.bf16.msra.mxu0 0
    %317 = vmatprep.subr.bf16.mxu0 0
    %318 = vmatpush1.bf16.msra.mxu0 0
    %319 = vmatprep.subr.bf16.mxu0 0
    %320 = vmatpush1.bf16.msra.mxu0 0
    %321 = vmatprep.subr.bf16.mxu0 0
    %322 = vmatpush1.bf16.msra.mxu0 0
    %323 = vmatprep.subr.bf16.mxu0 0
    %324 = vmatpush1.bf16.msra.mxu0 0
    %325 = vmatprep.subr.bf16.mxu0 0
    %326 = vmatpush1.bf16.msra.mxu0 0
    %327 = vmatprep.subr.bf16.mxu0 0
    %328 = vmatpush1.bf16.msra.mxu0 0
    %329 = vmatprep.mubr.bf16.mxu0 0
    %330 = vmatmul.mubr.bf16.gmra.mrb[0].mxu0 %v265
    %v331 = vpop.f32.mrb[0].mxu0
    %v332 = vadd.f32 %v295, %v331
    %v333 = vpop.f32.mrb[0].mxu0
    %v334 = vpop.f32.mrb[0].mxu0
    %v335 = vadd.f32 %v295, %v334
    %v336 = vpop.f32.mrb[0].mxu0
    %337 = vdwg.mxu0
    %v338 = vmax.f32 %v332, 0.0
    %v339 = vmax.f32 %v335, 0.0
    %v340 = vpack.c.bf16 %v339, %v338
    %v341 = vld [vmem:[#allocation6] sm:$0xff]
    %v342 = vld [vmem:[#allocation6 + $0x8] sm:$0xff]
    %v343 = vld [vmem:[#allocation6 + $0x10] sm:$0xff]
    %v344 = vld [vmem:[#allocation6 + $0x18] sm:$0xff]
    %v345 = vld [vmem:[#allocation6 + $0x20] sm:$0xff]
    %v346 = vld [vmem:[#allocation6 + $0x28] sm:$0xff]
    %v347 = vld [vmem:[#allocation6 + $0x30] sm:$0xff]
    %v348 = vld [vmem:[#allocation6 + $0x38] sm:$0xff]
    %v349 = vld [vmem:[#allocation6 + $0x40] sm:$0xff]
    %v350 = vld [vmem:[#allocation6 + $0x48] sm:$0xff]
    %v351 = vld [vmem:[#allocation6 + $0x50] sm:$0xff]
    %v352 = vld [vmem:[#allocation6 + $0x58] sm:$0xff]
    %v353 = vld [vmem:[#allocation6 + $0x60] sm:$0xff]
    %v354 = vld [vmem:[#allocation6 + $0x68] sm:$0xff]
    %v355 = vld [vmem:[#allocation6 + $0x70] sm:$0xff]
    %v356 = vld [vmem:[#allocation6 + $0x78] sm:$0xff]
    %v357 = vpack.c.bf16 %v342, %v341
    %v358 = vpack.c.bf16 %v344, %v343
    %v359 = vpack.c.bf16 %v346, %v345
    %v360 = vpack.c.bf16 %v348, %v347
    %v361 = vpack.c.bf16 %v350, %v349
    %v362 = vpack.c.bf16 %v352, %v351
    %v363 = vpack.c.bf16 %v354, %v353
    %v364 = vpack.c.bf16 %v356, %v355
    %365 = vmatprep.subr.bf16.mxu0 0
    %366 = vmatpush1.bf16.msra.mxu0 %v357
    %367 = vmatprep.subr.bf16.mxu0 0
    %368 = vmatpush1.bf16.msra.mxu0 %v358
    %369 = vmatprep.subr.bf16.mxu0 0
    %370 = vmatpush1.bf16.msra.mxu0 %v359
    %371 = vmatprep.subr.bf16.mxu0 0
    %372 = vmatpush1.bf16.msra.mxu0 %v360
    %373 = vmatprep.subr.bf16.mxu0 0
    %374 = vmatpush1.bf16.msra.mxu0 %v361
    %375 = vmatprep.subr.bf16.mxu0 0
    %376 = vmatpush1.bf16.msra.mxu0 %v362
    %377 = vmatprep.subr.bf16.mxu0 0
    %378 = vmatpush1.bf16.msra.mxu0 %v363
    %379 = vmatprep.subr.bf16.mxu0 0
    %380 = vmatpush1.bf16.msra.mxu0 %v364
    %381 = vmatprep.subr.bf16.mxu0 0
    %382 = vmatpush1.bf16.msra.mxu0 0
    %383 = vmatprep.subr.bf16.mxu0 0
    %384 = vmatpush1.bf16.msra.mxu0 0
    %385 = vmatprep.subr.bf16.mxu0 0
    %386 = vmatpush1.bf16.msra.mxu0 0
    %387 = vmatprep.subr.bf16.mxu0 0
    %388 = vmatpush1.bf16.msra.mxu0 0
    %389 = vmatprep.subr.bf16.mxu0 0
    %390 = vmatpush1.bf16.msra.mxu0 0
    %391 = vmatprep.subr.bf16.mxu0 0
    %392 = vmatpush1.bf16.msra.mxu0 0
    %393 = vmatprep.subr.bf16.mxu0 0
    %394 = vmatpush1.bf16.msra.mxu0 0
    %395 = vmatprep.subr.bf16.mxu0 0
    %396 = vmatpush1.bf16.msra.mxu0 0
    %397 = vmatprep.mubr.bf16.mxu0 0
    %398 = vmatmul.mubr.bf16.gmra.mrb[0].mxu0 %v340
    %v399 = vpop.f32.mrb[0].mxu0
    %v400 = vadd.f32 0.0, %v399
    %v401 = vpop.f32.mrb[0].mxu0
    %v402 = vpop.f32.mrb[0].mxu0
    %v403 = vadd.f32 0.0, %v402
    %v404 = vpop.f32.mrb[0].mxu0
    %405 = vdwg.mxu0
    %v406 = vpack.c.bf16 %v403, %v400
    %v407 = vld [vmem:[#allocation7] sm:$0x1]
    %v409 = vlaneseq
    %v410 = vshrl.u32 %v409, 7
    %v411 = vsub.s32 0, %v410
    %v412 = vrot.slane %v407, %v411
    %414 = vmatprep.subr.bf16.mxu0 0
    %415 = vmatpush1.bf16.msra.mxu0 %v406
    %416 = vmatprep.subr.bf16.mxu0 0
    %417 = vmatpush1.bf16.msra.mxu0 0
    %418 = vmatprep.subr.bf16.mxu0 0
    %419 = vmatpush1.bf16.msra.mxu0 0
    %420 = vmatprep.subr.bf16.mxu0 0
    %421 = vmatpush1.bf16.msra.mxu0 0
    %422 = vmatprep.subr.bf16.mxu0 0
    %423 = vmatpush1.bf16.msra.mxu0 0
    %424 = vmatprep.subr.bf16.mxu0 0
    %425 = vmatpush1.bf16.msra.mxu0 0
    %426 = vmatprep.subr.bf16.mxu0 0
    %427 = vmatpush1.bf16.msra.mxu0 0
    %428 = vmatprep.subr.bf16.mxu0 0
    %429 = vmatpush1.bf16.msra.mxu0 0
    %430 = vmatprep.subr.bf16.mxu0 0
    %431 = vmatpush1.bf16.msra.mxu0 0
    %432 = vmatprep.subr.bf16.mxu0 0
    %433 = vmatpush1.bf16.msra.mxu0 0
    %434 = vmatprep.subr.bf16.mxu0 0
    %435 = vmatpush1.bf16.msra.mxu0 0
    %436 = vmatprep.subr.bf16.mxu0 0
    %437 = vmatpush1.bf16.msra.mxu0 0
    %438 = vmatprep.subr.bf16.mxu0 0
    %439 = vmatpush1.bf16.msra.mxu0 0
    %440 = vmatprep.subr.bf16.mxu0 0
    %441 = vmatpush1.bf16.msra.mxu0 0
    %442 = vmatprep.subr.bf16.mxu0 0
    %443 = vmatpush1.bf16.msra.mxu0 0
    %444 = vmatprep.subr.bf16.mxu0 0
    %445 = vmatpush1.bf16.msra.mxu0 0
    %446 = vmatprep.mubr.bf16.mxu0 0
    %447 = vmatmul.mubr.bf16.gmra.mrb[0].mxu0 %v105
    %v448 = vpop.f32.mrb[0].mxu0
    %v449 = vadd.f32 %v412, %v448
    %v450 = vpop.f32.mrb[0].mxu0
    %v451 = vpop.f32.mrb[0].mxu0
    %v452 = vadd.f32 %v412, %v451
    %v453 = vpop.f32.mrb[0].mxu0
    %454 = vdwg.mxu0
    %v455 = vmax.f32 %v449, 0.0
    %v456 = vmax.f32 %v452, 0.0
    %v457 = vadd.f32 %v455, %v215
    %v458 = vadd.f32 %v456, %v218
    %v459 = vld [vmem:[#allocation9] sm:$0xff]
    %v461 = vsel %vm103, %v459, 0
    %463 = vmatprep.subr.mxu0 0.0
    %464 = vmatpush1.msra.mxu0 %v457
    %465 = vmatprep.subr.mxu0 0.0
    %466 = vmatpush1.msra.mxu0 %v458
    %467 = vmatprep.subr.mxu0 0.0
    %468 = vmatpush1.msra.mxu0 0.0
    %469 = vmatprep.subr.mxu0 0.0
    %470 = vmatpush1.msra.mxu0 0.0
    %471 = vmatprep.subr.mxu0 0.0
    %472 = vmatpush1.msra.mxu0 0.0
    %473 = vmatprep.subr.mxu0 0.0
    %474 = vmatpush1.msra.mxu0 0.0
    %475 = vmatprep.subr.mxu0 0.0
    %476 = vmatpush1.msra.mxu0 0.0
    %477 = vmatprep.subr.mxu0 0.0
    %478 = vmatpush1.msra.mxu0 0.0
    %479 = vmatprep.subr.mxu0 0.0
    %480 = vmatpush1.msra.mxu0 0.0
    %481 = vmatprep.subr.mxu0 0.0
    %482 = vmatpush1.msra.mxu0 0.0
    %483 = vmatprep.subr.mxu0 0.0
    %484 = vmatpush1.msra.mxu0 0.0
    %485 = vmatprep.subr.mxu0 0.0
    %486 = vmatpush1.msra.mxu0 0.0
    %487 = vmatprep.subr.mxu0 0.0
    %488 = vmatpush1.msra.mxu0 0.0
    %489 = vmatprep.subr.mxu0 0.0
    %490 = vmatpush1.msra.mxu0 0.0
    %491 = vmatprep.subr.mxu0 0.0
    %492 = vmatpush1.msra.mxu0 0.0
    %493 = vmatprep.subr.mxu0 0.0
    %494 = vmatpush1.msra.mxu0 0.0
    %495 = vmatprep.subr.mxu0 0.0
    %496 = vmatpush1.msra.mxu0 0.0
    %497 = vmatprep.subr.mxu0 0.0
    %498 = vmatpush1.msra.mxu0 0.0
    %499 = vmatprep.subr.mxu0 0.0
    %500 = vmatpush1.msra.mxu0 0.0
    %501 = vmatprep.subr.mxu0 0.0
    %502 = vmatpush1.msra.mxu0 0.0
    %503 = vmatprep.subr.mxu0 0.0
    %504 = vmatpush1.msra.mxu0 0.0
    %505 = vmatprep.subr.mxu0 0.0
    %506 = vmatpush1.msra.mxu0 0.0
    %507 = vmatprep.subr.mxu0 0.0
    %508 = vmatpush1.msra.mxu0 0.0
    %509 = vmatprep.subr.mxu0 0.0
    %510 = vmatpush1.msra.mxu0 0.0
    %511 = vmatprep.subr.mxu0 0.0
    %512 = vmatpush1.msra.mxu0 0.0
    %513 = vmatprep.subr.mxu0 0.0
    %514 = vmatpush1.msra.mxu0 0.0
    %515 = vmatprep.subr.mxu0 0.0
    %516 = vmatpush1.msra.mxu0 0.0
    %517 = vmatprep.subr.mxu0 0.0
    %518 = vmatpush1.msra.mxu0 0.0
    %519 = vmatprep.subr.mxu0 0.0
    %520 = vmatpush1.msra.mxu0 0.0
    %521 = vmatprep.subr.mxu0 0.0
    %522 = vmatpush1.msra.mxu0 0.0
    %523 = vmatprep.subr.mxu0 0.0
    %524 = vmatpush1.msra.mxu0 0.0
    %525 = vmatprep.subr.mxu0 0.0
    %526 = vmatpush1.msra.mxu0 0.0
    %527 = vmatprep.mubr.f32.mxu0 0.0
    %528 = vmatmul.mubr.f32.gmra.mrb[0].mxu0 %v461
    %v529 = vpop.f32.mrb[0].mxu0
    %v530 = vadd.f32 0.0, %v529
    %v531 = vpop.f32.mrb[0].mxu0
    %532 = vdwg.mxu0
    %533 = vst [vmem:[%s9] sm:$0xff] %v530
    // Predicated region
    $region58: #{gnn_residual_feature_extractor_forward.1} parent=1 // pred_check
      _
    $region59: #{gnn_residual_feature_extractor_forward.1} parent=1 // pred_check_branch
      %535 = sbr.rel (0) target = $region61
    $region60: #{gnn_residual_feature_extractor_forward.1} parent=1 // pred_region
      _
    $region61: #{gnn_residual_feature_extractor_forward.1} parent=1 // pred_fallthru
      _
    // Predicated region
    $region62: #{gnn_residual_feature_extractor_forward.1} parent=1 // pred_check
      _
    $region63: #{gnn_residual_feature_extractor_forward.1} parent=1 // pred_check_branch
      %537 = sbr.rel (0) target = $region65
    $region64: #{gnn_residual_feature_extractor_forward.1} parent=1 // pred_region
      _
    $region65: #{gnn_residual_feature_extractor_forward.1} parent=1 // pred_fallthru
      _
    %538 = vsyncpa [#allocation3], 1
    %539 = vsyncpa [#allocation5], 1
    %540 = vsyncpa [#allocation8], 1

</llo_original>
